<compile_context>
chip_gen: v7x
topology: tpu7x:2x2x1
jax: 0.10.0
libtpu: 0.0.40
codegen_flags: <defaults>
</compile_context>

<pallas_src>
import functools

import jax
import jax.numpy as jnp
from jax.experimental import pallas as pl
from jax.experimental.pallas import tpu as pltpu


def _round_up(x, m):
    return (x + m - 1) // m * m


def _patch_embed_kernel(x_ref, w_ref, b_ref, o_ref, *, patch_len, stride, tile_p):
    # x_ref: (S_pad, C)            padded sequence slab for this batch element (VMEM resident)
    # w_ref: (patch_len, C, D_pad) weight reordered so w_ref[t, c, d] == W[c*patch_len + t, d]
    # b_ref: (1, D_pad)            bias (f32)
    # o_ref: (tile_p, D_pad)       output tile for patches [pt*tile_p, (pt+1)*tile_p)
    pt = pl.program_id(1)
    base = pt * (tile_p * stride)  # element offset of this tile's first patch

    d_pad = o_ref.shape[-1]
    acc = jnp.zeros((tile_p, d_pad), jnp.float32)

    # Fused patch extraction: for each in-patch offset t, rows (p*stride + t) of x for the
    # tile's patches p form a strided sublane read; contracting against the (C, D_pad)
    # weight slice and summing over t reproduces unfold->permute->reshape->Linear exactly.
    for t in range(patch_len):  # static, unrolled (patch_len is small)
        xt = x_ref[pl.ds(base + t, tile_p, stride=stride), :]          # (tile_p, C)
        acc = acc + jnp.dot(xt, w_ref[t], preferred_element_type=jnp.float32)

    o_ref[...] = (acc + b_ref[...]).astype(o_ref.dtype)                # bias add in f32


def patch_embedding(x, w, b, patch_len, stride, *, compute_dtype=None, tile_p=None):
    """Pallas TPU equivalent of PatchEmbedding.forward.

    x: (B, S, C) ; w: (patch_len*C, d_model) == torch nn.Linear weight transposed ; b: (d_model,)
    Returns (B, num_patches, d_model) in x.dtype.
    """
    B, S, C = x.shape
    F, D = w.shape
    assert F == patch_len * C, "weight in_features must equal patch_len * input_dim"
    num_patches = (S - patch_len) // stride + 1
    assert num_patches >= 1
    out_dtype = x.dtype

    # ---- tiling / padding choices ----------------------------------------------------
    if tile_p is None:
        tile_p = min(512, _round_up(num_patches, 8))   # big tiles amortize per-step overhead
    tile_p = _round_up(tile_p, 8)                      # sublane multiple
    n_pt = int(pl.cdiv(num_patches, tile_p))
    p_pad = n_pt * tile_p

    d_pad = _round_up(D, 128)                          # lane-dense output stores

    # Pad the sequence so every (possibly padded) patch row reads in-bounds.
    s_need = (p_pad - 1) * stride + patch_len
    s_pad = max(S, s_need)
    if s_pad > S:
        x = jnp.pad(x, ((0, 0), (0, s_pad - S), (0, 0)))

    # Reorder weight: feature index f = c*patch_len + t  ->  w_stack[t, c, :]; pad d_model.
    w_stack = jnp.transpose(w.reshape(C, patch_len, D), (1, 0, 2))
    if d_pad > D:
        w_stack = jnp.pad(w_stack, ((0, 0), (0, 0), (0, d_pad - D)))
    b2 = jnp.pad(b.astype(jnp.float32), (0, d_pad - D)).reshape(1, d_pad)

    if compute_dtype is not None:  # e.g. jnp.bfloat16 on v6e/v7x; accumulation stays f32
        x = x.astype(compute_dtype)
        w_stack = w_stack.astype(compute_dtype)

    # ---- conservative VMEM budget (lane/sublane padded, double-buffered) --------------
    def _padded_bytes(shape, dtype):
        *lead, sl, ln = shape
        n = 1
        for d in lead:
            n *= d
        return n * _round_up(sl, 8) * _round_up(ln, 128) * jnp.dtype(dtype).itemsize

    vmem_need = (
        2 * _padded_bytes((s_pad, C), x.dtype)
        + 2 * _padded_bytes((tile_p, d_pad), out_dtype)
        + _padded_bytes((patch_len, C, d_pad), w_stack.dtype)
        + _padded_bytes((1, d_pad), jnp.float32)
    )
    vmem_limit = int(max(16 * 2**20, min(96 * 2**20, 2 * vmem_need)))  # well under v7x's 64 MiB here

    kernel = functools.partial(
        _patch_embed_kernel, patch_len=patch_len, stride=stride, tile_p=tile_p
    )

    flops = 2 * B * p_pad * patch_len * C * d_pad
    bytes_accessed = (
        x.size * x.dtype.itemsize
        + w_stack.size * w_stack.dtype.itemsize
        + b2.size * 4
        + B * p_pad * d_pad * jnp.dtype(out_dtype).itemsize
    )

    out = pl.pallas_call(
        kernel,
        out_shape=jax.ShapeDtypeStruct((B, p_pad, d_pad), out_dtype),
        grid=(B, n_pt),
        in_specs=[
            # Per-batch sequence slab; block index depends only on the batch axis, so it
            # stays resident in VMEM across the patch-tile axis (no redundant DMA).
            pl.BlockSpec((None, s_pad, C), lambda bi, pi: (bi, 0, 0)),
            pl.BlockSpec((patch_len, C, d_pad), lambda bi, pi: (0, 0, 0)),
            pl.BlockSpec((1, d_pad), lambda bi, pi: (0, 0)),
        ],
        out_specs=pl.BlockSpec((None, tile_p, d_pad), lambda bi, pi: (bi, pi, 0)),
        compiler_params=pltpu.CompilerParams(
            dimension_semantics=("parallel", "parallel"),
            vmem_limit_bytes=vmem_limit,
        ),
        cost_estimate=pl.CostEstimate(
            flops=flops, transcendentals=0, bytes_accessed=bytes_accessed
        ),
    )(x, w_stack, b2)

    # Strip patch-row / lane padding.
    if p_pad != num_patches or d_pad != D:
        out = out[:, :num_patches, :D]
    return out


if __name__ == "__main__":
    key = jax.random.PRNGKey(0)
    batch, seq_len, input_dim = 2, 16, 4
    patch_len, stride, d_model = 4, 4, 32

    k1, k2, k3 = jax.random.split(key, 3)
    x = jax.random.normal(k1, (batch, seq_len, input_dim), jnp.float32)

    feat = patch_len * input_dim
    bound = 1.0 / (feat ** 0.5)  # deterministic init mimicking nn.Linear's uniform range
    w = jax.random.uniform(k2, (feat, d_model), jnp.float32, -bound, bound)
    b = jax.random.uniform(k3, (d_model,), jnp.float32, -bound, bound)

    out = patch_embedding(x, w, b, patch_len, stride)
    out = jax.block_until_ready(out)

    # pure-JAX reference (same semantics as the PyTorch forward)
    num_patches = (seq_len - patch_len) // stride + 1
    xt = jnp.transpose(x, (0, 2, 1))
    idx = jnp.arange(num_patches)[:, None] * stride + jnp.arange(patch_len)[None, :]
    p = xt[:, :, idx]                                     # (B, C, P, L)
    p = jnp.transpose(p, (0, 2, 1, 3)).reshape(batch, num_patches, feat)
    ref = p @ w + b

    assert out.shape == (batch, num_patches, d_model), out.shape
    assert jnp.allclose(out, ref, atol=1e-5, rtol=1e-5), "mismatch vs reference"
    print("KERNEL_OK")
</pallas_src>

<mosaic_0001>
module attributes {stable_mosaic.version = 11 : i64} {
  func.func @_patch_embed_kernel(%arg0: i32, %arg1: i32, %arg2: memref<1x32x4xf32, #tpu.memory_space<vmem>>, %arg3: memref<4x4x128xf32, #tpu.memory_space<vmem>>, %arg4: memref<1x128xf32, #tpu.memory_space<vmem>>, %arg5: memref<1x8x128xf32, #tpu.memory_space<vmem>>) attributes {dimension_semantics = [#tpu.dimension_semantics<parallel>, #tpu.dimension_semantics<parallel>], iteration_bounds = array<i64: 2, 1>, scalar_prefetch = 0 : i64, scratch_operands = 0 : i64, tpu.core_type = #tpu.core_type<tc>, window_params = [{transform_indices = @transform_0, window_bounds = array<i64: 1, 32, 4>}, {pipeline_mode = #tpu.pipeline_mode<synchronous>, transform_indices = @transform_1, window_bounds = array<i64: 4, 4, 128>}, {pipeline_mode = #tpu.pipeline_mode<synchronous>, transform_indices = @transform_2, window_bounds = array<i64: 1, 128>}, {transform_indices = @transform_3, window_bounds = array<i64: 1, 8, 128>}]} {
    %c32_i32 = arith.constant 32 : i32
    %0 = arith.muli %arg1, %c32_i32 : i32
    %cst = arith.constant 0.000000e+00 : f32
    %1 = vector.broadcast %cst : f32 to vector<8x128xf32>
    %c0_i32 = arith.constant 0 : i32
    %2 = arith.addi %0, %c0_i32 : i32
    %c0 = arith.constant 0 : index
    %3 = arith.index_cast %2 : i32 to index
    %c0_0 = arith.constant 0 : index
    %4 = tpu.strided_load %arg2[%c0, %3, %c0_0] {strides = array<i32: 1, 4, 1>} : memref<1x32x4xf32, #tpu.memory_space<vmem>>, vector<1x8x4xf32>
    %5 = vector.shape_cast %4 : vector<1x8x4xf32> to vector<8x4xf32>
    %c0_1 = arith.constant 0 : index
    %c0_2 = arith.constant 0 : index
    %c0_3 = arith.constant 0 : index
    %6 = vector.load %arg3[%c0_1, %c0_2, %c0_3] : memref<4x4x128xf32, #tpu.memory_space<vmem>>, vector<1x4x128xf32>
    %7 = vector.shape_cast %6 : vector<1x4x128xf32> to vector<4x128xf32>
    %cst_4 = arith.constant dense<0.000000e+00> : vector<8x128xf32>
    %8 = tpu.matmul %5, %7, %cst_4 {dimension_numbers = #tpu.dot_dimension_numbers<[1], [0], [0], [1], [0, 0, 1, 1], [], []>} : vector<8x4xf32>, vector<4x128xf32>, vector<8x128xf32> -> vector<8x128xf32>
    %9 = arith.addf %1, %8 : vector<8x128xf32>
    %c1_i32 = arith.constant 1 : i32
    %10 = arith.addi %0, %c1_i32 : i32
    %c0_5 = arith.constant 0 : index
    %11 = arith.index_cast %10 : i32 to index
    %c0_6 = arith.constant 0 : index
    %12 = tpu.strided_load %arg2[%c0_5, %11, %c0_6] {strides = array<i32: 1, 4, 1>} : memref<1x32x4xf32, #tpu.memory_space<vmem>>, vector<1x8x4xf32>
    %13 = vector.shape_cast %12 : vector<1x8x4xf32> to vector<8x4xf32>
    %c1 = arith.constant 1 : index
    %c0_7 = arith.constant 0 : index
    %c0_8 = arith.constant 0 : index
    %14 = vector.load %arg3[%c1, %c0_7, %c0_8] : memref<4x4x128xf32, #tpu.memory_space<vmem>>, vector<1x4x128xf32>
    %15 = vector.shape_cast %14 : vector<1x4x128xf32> to vector<4x128xf32>
    %cst_9 = arith.constant dense<0.000000e+00> : vector<8x128xf32>
    %16 = tpu.matmul %13, %15, %cst_9 {dimension_numbers = #tpu.dot_dimension_numbers<[1], [0], [0], [1], [0, 0, 1, 1], [], []>} : vector<8x4xf32>, vector<4x128xf32>, vector<8x128xf32> -> vector<8x128xf32>
    %17 = arith.addf %9, %16 : vector<8x128xf32>
    %c2_i32 = arith.constant 2 : i32
    %18 = arith.addi %0, %c2_i32 : i32
    %c0_10 = arith.constant 0 : index
    %19 = arith.index_cast %18 : i32 to index
    %c0_11 = arith.constant 0 : index
    %20 = tpu.strided_load %arg2[%c0_10, %19, %c0_11] {strides = array<i32: 1, 4, 1>} : memref<1x32x4xf32, #tpu.memory_space<vmem>>, vector<1x8x4xf32>
    %21 = vector.shape_cast %20 : vector<1x8x4xf32> to vector<8x4xf32>
    %c2 = arith.constant 2 : index
    %c0_12 = arith.constant 0 : index
    %c0_13 = arith.constant 0 : index
    %22 = vector.load %arg3[%c2, %c0_12, %c0_13] : memref<4x4x128xf32, #tpu.memory_space<vmem>>, vector<1x4x128xf32>
    %23 = vector.shape_cast %22 : vector<1x4x128xf32> to vector<4x128xf32>
    %cst_14 = arith.constant dense<0.000000e+00> : vector<8x128xf32>
    %24 = tpu.matmul %21, %23, %cst_14 {dimension_numbers = #tpu.dot_dimension_numbers<[1], [0], [0], [1], [0, 0, 1, 1], [], []>} : vector<8x4xf32>, vector<4x128xf32>, vector<8x128xf32> -> vector<8x128xf32>
    %25 = arith.addf %17, %24 : vector<8x128xf32>
    %c3_i32 = arith.constant 3 : i32
    %26 = arith.addi %0, %c3_i32 : i32
    %c0_15 = arith.constant 0 : index
    %27 = arith.index_cast %26 : i32 to index
    %c0_16 = arith.constant 0 : index
    %28 = tpu.strided_load %arg2[%c0_15, %27, %c0_16] {strides = array<i32: 1, 4, 1>} : memref<1x32x4xf32, #tpu.memory_space<vmem>>, vector<1x8x4xf32>
    %29 = vector.shape_cast %28 : vector<1x8x4xf32> to vector<8x4xf32>
    %c3 = arith.constant 3 : index
    %c0_17 = arith.constant 0 : index
    %c0_18 = arith.constant 0 : index
    %30 = vector.load %arg3[%c3, %c0_17, %c0_18] : memref<4x4x128xf32, #tpu.memory_space<vmem>>, vector<1x4x128xf32>
    %31 = vector.shape_cast %30 : vector<1x4x128xf32> to vector<4x128xf32>
    %cst_19 = arith.constant dense<0.000000e+00> : vector<8x128xf32>
    %32 = tpu.matmul %29, %31, %cst_19 {dimension_numbers = #tpu.dot_dimension_numbers<[1], [0], [0], [1], [0, 0, 1, 1], [], []>} : vector<8x4xf32>, vector<4x128xf32>, vector<8x128xf32> -> vector<8x128xf32>
    %33 = arith.addf %25, %32 : vector<8x128xf32>
    %c0_20 = arith.constant 0 : index
    %c0_21 = arith.constant 0 : index
    %34 = vector.load %arg4[%c0_20, %c0_21] : memref<1x128xf32, #tpu.memory_space<vmem>>, vector<1x128xf32>
    %35 = vector.broadcast %34 : vector<1x128xf32> to vector<8x128xf32>
    %36 = arith.addf %33, %35 : vector<8x128xf32>
    %c0_22 = arith.constant 0 : index
    %c0_23 = arith.constant 0 : index
    %c0_24 = arith.constant 0 : index
    %37 = vector.load %arg5[%c0_22, %c0_23, %c0_24] : memref<1x8x128xf32, #tpu.memory_space<vmem>>, vector<1x8x128xf32>
    %38 = vector.shape_cast %37 : vector<1x8x128xf32> to vector<8x128xf32>
    %39 = vector.shape_cast %36 : vector<8x128xf32> to vector<1x8x128xf32>
    tpu.vector_store %arg5[%c0_22, %c0_23, %c0_24], %39 {strides = array<i32>} : memref<1x8x128xf32, #tpu.memory_space<vmem>>, vector<1x8x128xf32>,
    return
  }
  func.func @transform_0(%arg0: i32, %arg1: i32) -> (i32, i32, i32) {
    %c0_i32 = arith.constant 0 : i32
    %c0_i32_0 = arith.constant 0 : i32
    %c0_i32_1 = arith.constant 0 : i32
    return %arg0, %c0_i32, %c0_i32_0 : i32, i32, i32
  }
  func.func @transform_1(%arg0: i32, %arg1: i32) -> (i32, i32, i32) {
    %c0_i32 = arith.constant 0 : i32
    %c0_i32_0 = arith.constant 0 : i32
    %c0_i32_1 = arith.constant 0 : i32
    %c0_i32_2 = arith.constant 0 : i32
    return %c0_i32, %c0_i32_0, %c0_i32_1 : i32, i32, i32
  }
  func.func @transform_2(%arg0: i32, %arg1: i32) -> (i32, i32) {
    %c0_i32 = arith.constant 0 : i32
    %c0_i32_0 = arith.constant 0 : i32
    %c0_i32_1 = arith.constant 0 : i32
    return %c0_i32, %c0_i32_0 : i32, i32
  }
  func.func @transform_3(%arg0: i32, %arg1: i32) -> (i32, i32, i32) {
    %c0_i32 = arith.constant 0 : i32
    %c0_i32_0 = arith.constant 0 : i32
    return %arg0, %arg1, %c0_i32 : i32, i32, i32
  }
}

</mosaic_0001>

<llo_original>
// kernel: tpu_custom_call.1
$region0: #{tpu_custom_call.1}
  #allocation0 [shape = 'u32[]', space=smem, size = 0x4, offset = 0x4, fixed_abs, tag = 'smem constant byte address 0x4 - core index']
  #allocation1 [shape = 'u32[144,128]{1,0:T(1,128)}', space=vmem, size = 0x12000, scoped, tag = 'internal scratch']
  %s0 = inlined_call_operand.vmem [shape: f32[2,32,4], index: 0, kind: input, shape index: {}]
  %s1 = inlined_call_operand.vmem [shape: f32[4,4,128], index: 1, kind: input, shape index: {}]
  %s2 = inlined_call_operand.vmem [shape: f32[1,128], index: 2, kind: input, shape index: {}]
  %s3 = inlined_call_operand.hbm [shape: f32[2,8,128], index: 3, kind: output, shape index: {}]
  %s4 = sld [smem:[#allocation0]]
  $region45: #{tpu_custom_call.1} parent=0
    _
  %s6 = ssub.s32 1, %s4
  %s7 = scalar_select 0, %s6, %s4
  $region1: #{tpu_custom_call.1} parent=0
    #allocation2 [shape = 'u8[8192]{0}', space=vmem, size = 0x2000, scoped, tag = 'output window, operand 0']
    #allocation3 [shape = 's32[2]{0}', space=sflag, size = 0x8, scoped, tag = 'scoped memory for tpu_custom_call.1']
    %8 = vsyncpa [#allocation3], 0
    %s9 = scalar_lea.sflag [#allocation3], 1
    %10 = vsyncpa %s9, 0
    loop: start=0, step=1, limit=4
    $region2: #{tpu_custom_call.1} parent=1 // loop_pre_header
      _
    $region3: #{tpu_custom_call.1} parent=1 // loop_header
      %s12 = sphi 0, %s16
      %p13 = scmp.ge.s32.totalorder %s12, 4
      %s19 = sphi 0, %s31
      %s20 = sphi 0, %s27
      %s21 = sphi 0, %s19
      %s22 = sphi 0, %s20
      %s23 = sphi 0, %s21
      %s24 = sphi 0, %s22
      %s34 = sphi 0, %s36
      %s37 = sphi 0, %s34
      %s38 = sphi 0, %s37
      %s54 = sphi 0, %s38
      %s58 = sphi 0, %s58
      %s60 = sphi 0, %s58
      %s61 = sphi 0, %s60
      %s75 = sphi 0, %s61
      %s79 = sphi 0, %s79
      %s81 = sphi 0, %s79
      %s82 = sphi 0, %s81
      %s96 = sphi 0, %s82
      %s104 = sphi 0, %s106
      %s107 = sphi 0, %s104
      %s108 = sphi 0, %s107
      %s124 = sphi 0, %s108
    $region4: #{tpu_custom_call.1} parent=1 // loop_header_branch
      %15 = sbr.rel (%p13) target = $region8
    $region5: #{tpu_custom_call.1} parent=1 // loop_body
      %s17 = ssub.s32 %s12, 1
      %s18 = ssub.s32 %s12, 2
      %s25 = sadd.s32 1, %s20
      %p26 = scmp.ge.s32.totalorder %s25, 1
      %s27 = scalar_select %p26, 0, %s25
      %s28 = sadd.s32 1, %s19
      %s29 = scalar_select %p26, %s28, %s19
      %p30 = scmp.ge.s32.totalorder %s29, 2
      %s31 = scalar_select %p30, 0, %s29
      %s32 = ssub.s32 %s19, %s31
      %p33 = scmp.eq.s32.totalorder %s32, 0
      %s35 = sadd.s32 %s34, 1
      %s36 = scalar_select %p33, %s34, %s35
      %p39 = pneg %p33
      %p40 = scmp.eq.s32.totalorder %s12, 1
      %p41 = por %p39, %p40
      %p42 = scmp.ne.s32.totalorder %s34, %s37
      %p43 = scmp.eq.s32.totalorder %s12, 0
      %p44 = por %p42, %p43
      %p45 = scmp.ne.s32.totalorder %s34, %s37
      %p46 = scmp.eq.s32.totalorder %s17, 1
      %p47 = por %p45, %p46
      %p48 = scmp.ne.s32.totalorder %s37, %s38
      %p49 = scmp.eq.s32.totalorder %s17, 0
      %p50 = por %p48, %p49
      %p51 = scmp.ne.s32.totalorder %s37, %s38
      %p52 = scmp.eq.s32.totalorder %s18, 1
      %p53 = por %p51, %p52
      %p55 = scmp.ne.s32.totalorder %s38, %s54
      %p56 = scmp.eq.s32.totalorder %s18, 0
      %p57 = por %p55, %p56
      %s59 = sadd.s32 %s58, 1
      %p62 = scmp.eq.s32.totalorder %s12, 1
      %p63 = scmp.ne.s32.totalorder %s58, %s60
      %p64 = scmp.eq.s32.totalorder %s12, 0
      %p65 = por %p63, %p64
      %p66 = scmp.ne.s32.totalorder %s58, %s60
      %p67 = scmp.eq.s32.totalorder %s17, 1
      %p68 = por %p66, %p67
      %p69 = scmp.ne.s32.totalorder %s60, %s61
      %p70 = scmp.eq.s32.totalorder %s17, 0
      %p71 = por %p69, %p70
      %p72 = scmp.ne.s32.totalorder %s60, %s61
      %p73 = scmp.eq.s32.totalorder %s18, 1
      %p74 = por %p72, %p73
      %p76 = scmp.ne.s32.totalorder %s61, %s75
      %p77 = scmp.eq.s32.totalorder %s18, 0
      %p78 = por %p76, %p77
      %s80 = sadd.s32 %s79, 1
      %p83 = scmp.eq.s32.totalorder %s12, 1
      %p84 = scmp.ne.s32.totalorder %s79, %s81
      %p85 = scmp.eq.s32.totalorder %s12, 0
      %p86 = por %p84, %p85
      %p87 = scmp.ne.s32.totalorder %s79, %s81
      %p88 = scmp.eq.s32.totalorder %s17, 1
      %p89 = por %p87, %p88
      %p90 = scmp.ne.s32.totalorder %s81, %s82
      %p91 = scmp.eq.s32.totalorder %s17, 0
      %p92 = por %p90, %p91
      %p93 = scmp.ne.s32.totalorder %s81, %s82
      %p94 = scmp.eq.s32.totalorder %s18, 1
      %p95 = por %p93, %p94
      %p97 = scmp.ne.s32.totalorder %s82, %s96
      %p98 = scmp.eq.s32.totalorder %s18, 0
      %p99 = por %p97, %p98
      %s100 = ssub.s32 %s19, %s31
      %s101 = ssub.s32 %s20, %s27
      %s102 = sor.u32 %s100, %s101
      %p103 = scmp.eq.s32.totalorder %s102, 0
      %s105 = sadd.s32 %s104, 1
      %s106 = scalar_select %p103, %s104, %s105
      %p109 = pneg %p103
      %p110 = scmp.eq.s32.totalorder %s12, 1
      %p111 = por %p109, %p110
      %p112 = scmp.ne.s32.totalorder %s104, %s107
      %p113 = scmp.eq.s32.totalorder %s12, 0
      %p114 = por %p112, %p113
      %p115 = scmp.ne.s32.totalorder %s104, %s107
      %p116 = scmp.eq.s32.totalorder %s17, 1
      %p117 = por %p115, %p116
      %p118 = scmp.ne.s32.totalorder %s107, %s108
      %p119 = scmp.eq.s32.totalorder %s17, 0
      %p120 = por %p118, %p119
      %p121 = scmp.ne.s32.totalorder %s107, %s108
      %p122 = scmp.eq.s32.totalorder %s18, 1
      %p123 = por %p121, %p122
      %p125 = scmp.ne.s32.totalorder %s108, %s124
      %p126 = scmp.eq.s32.totalorder %s18, 0
      %p127 = por %p125, %p126
      %p128 = scmp.le.s32.totalorder 1, %s12
      %p129 = scmp.lt.s32.totalorder %s12, 3
      %p130 = pnand %p128, %p129
      %p131 = pneg %p130
      // Predicated region
      $region9: #{tpu_custom_call.1} parent=5 // pred_check
        _
      $region10: #{tpu_custom_call.1} parent=5 // pred_check_branch
        %133 = sbr.rel (%p130) target = $region12
      $region11: #{tpu_custom_call.1} parent=5 // pred_region
        %s134 = ssub.s32 %s12, 1
        // Predicated region
        $region13: #{tpu_custom_call.1} parent=11 // pred_check
          %p135 = pneg %p71
        $region14: #{tpu_custom_call.1} parent=11 // pred_check_branch
          %137 = sbr.rel (%p135) target = $region16
        $region15: #{tpu_custom_call.1} parent=11 // pred_region
          _
        $region16: #{tpu_custom_call.1} parent=11 // pred_fallthru
          _
        // Predicated region
        $region17: #{tpu_custom_call.1} parent=11 // pred_check
          %p138 = pneg %p92
        $region18: #{tpu_custom_call.1} parent=11 // pred_check_branch
          %140 = sbr.rel (%p138) target = $region20
        $region19: #{tpu_custom_call.1} parent=11 // pred_region
          _
        $region20: #{tpu_custom_call.1} parent=11 // pred_fallthru
          _
      $region12: #{tpu_custom_call.1} parent=5 // pred_fallthru
        _
      %p141 = scmp.lt.s32.totalorder %s12, 2
      // Predicated region
      $region21: #{tpu_custom_call.1} parent=5 // pred_check
        %p142 = pneg %p141
      $region22: #{tpu_custom_call.1} parent=5 // pred_check_branch
        %144 = sbr.rel (%p142) target = $region24
      $region23: #{tpu_custom_call.1} parent=5 // pred_region
        // Predicated region
        $region25: #{tpu_custom_call.1} parent=23 // pred_check
          %p145 = pneg %p44
        $region26: #{tpu_custom_call.1} parent=23 // pred_check_branch
          %147 = sbr.rel (%p145) target = $region28
        $region27: #{tpu_custom_call.1} parent=23 // pred_region
          %p148 = scmp.lt.s32.totalorder %s19, 1
          %s149 = scalar_select %p148, %s19, 1
          %s150 = smul.addr %s149, 4
          %s151 = smul.addr %s150, 8
          %s152 = scalar_lea.vmem %s0, %s151
        $region28: #{tpu_custom_call.1} parent=23 // pred_fallthru
          _
      $region24: #{tpu_custom_call.1} parent=5 // pred_fallthru
        _
      %p153 = scmp.le.s32.totalorder 1, %s12
      %p154 = scmp.lt.s32.totalorder %s12, 3
      %p155 = pnand %p153, %p154
      %p156 = pneg %p155
      // Predicated region
      $region29: #{tpu_custom_call.1} parent=5 // pred_check
        _
      $region30: #{tpu_custom_call.1} parent=5 // pred_check_branch
        %158 = sbr.rel (%p155) target = $region32
      $region31: #{tpu_custom_call.1} parent=5 // pred_region
        %s159 = ssub.s32 %s12, 1
        %p160 = scmp.lt.s32.totalorder %s21, 1
        %s161 = scalar_select %p160, %s21, 1
        %s162 = smul.addr %s161, 4
        %s163 = smul.addr %s162, 8
        %s164 = scalar_lea.vmem %s0, %s163
        %p165 = pneg %p50
        %p166 = pneg %p47
        %p167 = pneg %p71
        %p168 = pneg %p68
        %p169 = pneg %p92
        %p170 = pneg %p89
        %p171 = pneg %p120
        %p172 = pneg %p117
        %s173 = sand.u32 %s107, 1
        %s174 = scalar_lea.sflag [#allocation3], %s173
        %s175 = sand.u32 %s107, 1
        %s176 = smul.addr %s175, 8
        %s177 = scalar_lea.vmem [#allocation2], %s176
        %p178 = scmp.lt.s32.totalorder %s21, 1
        %s179 = scalar_select %p178, %s21, 1
        %s180 = smul.addr %s179, 4
        %s181 = smul.addr %s180, 8
        %s182 = scalar_lea.vmem %s0, %s181
        %s183 = smul.u32 %s22, 32
        %s184 = scalar_lea.vmem %s182, %s183
        %v185 = vld [vmem:[%s184] ss:$4 sm:$0xff]
        %v186 = vld [vmem:[%s1] sm:$0xf]
        %s187 = sadd.s32 %s183, 1
        %s188 = scalar_lea.vmem %s182, %s187
        %v189 = vld [vmem:[%s188] ss:$4 sm:$0xff]
        %s190 = scalar_lea.vmem %s1, 4
        %v191 = vld [vmem:[%s190] sm:$0xf]
        %vm192 = vcmask 31744
        %v194 = vsel %vm192, %v189, 0
        %vm196 = vcmask 1043456
        %v198 = vsel %vm196, %v191, 0
        %200 = vmatprep.subr.mxu0 0.0
        %201 = vmatpush1.msra.mxu0 %v198
        %202 = vmatprep.subr.mxu0 0.0
        %203 = vmatpush1.msra.mxu0 0.0
        %204 = vmatprep.subr.mxu0 0.0
        %205 = vmatpush1.msra.mxu0 0.0
        %206 = vmatprep.subr.mxu0 0.0
        %207 = vmatpush1.msra.mxu0 0.0
        %208 = vmatprep.subr.mxu0 0.0
        %209 = vmatpush1.msra.mxu0 0.0
        %210 = vmatprep.subr.mxu0 0.0
        %211 = vmatpush1.msra.mxu0 0.0
        %212 = vmatprep.subr.mxu0 0.0
        %213 = vmatpush1.msra.mxu0 0.0
        %214 = vmatprep.subr.mxu0 0.0
        %215 = vmatpush1.msra.mxu0 0.0
        %216 = vmatprep.subr.mxu0 0.0
        %217 = vmatpush1.msra.mxu0 0.0
        %218 = vmatprep.subr.mxu0 0.0
        %219 = vmatpush1.msra.mxu0 0.0
        %220 = vmatprep.subr.mxu0 0.0
        %221 = vmatpush1.msra.mxu0 0.0
        %222 = vmatprep.subr.mxu0 0.0
        %223 = vmatpush1.msra.mxu0 0.0
        %224 = vmatprep.subr.mxu0 0.0
        %225 = vmatpush1.msra.mxu0 0.0
        %226 = vmatprep.subr.mxu0 0.0
        %227 = vmatpush1.msra.mxu0 0.0
        %228 = vmatprep.subr.mxu0 0.0
        %229 = vmatpush1.msra.mxu0 0.0
        %230 = vmatprep.subr.mxu0 0.0
        %231 = vmatpush1.msra.mxu0 0.0
        %232 = vmatprep.subr.mxu0 0.0
        %233 = vmatpush1.msra.mxu0 0.0
        %234 = vmatprep.subr.mxu0 0.0
        %235 = vmatpush1.msra.mxu0 0.0
        %236 = vmatprep.subr.mxu0 0.0
        %237 = vmatpush1.msra.mxu0 0.0
        %238 = vmatprep.subr.mxu0 0.0
        %239 = vmatpush1.msra.mxu0 0.0
        %240 = vmatprep.subr.mxu0 0.0
        %241 = vmatpush1.msra.mxu0 0.0
        %242 = vmatprep.subr.mxu0 0.0
        %243 = vmatpush1.msra.mxu0 0.0
        %244 = vmatprep.subr.mxu0 0.0
        %245 = vmatpush1.msra.mxu0 0.0
        %246 = vmatprep.subr.mxu0 0.0
        %247 = vmatpush1.msra.mxu0 0.0
        %248 = vmatprep.subr.mxu0 0.0
        %249 = vmatpush1.msra.mxu0 0.0
        %250 = vmatprep.subr.mxu0 0.0
        %251 = vmatpush1.msra.mxu0 0.0
        %252 = vmatprep.subr.mxu0 0.0
        %253 = vmatpush1.msra.mxu0 0.0
        %254 = vmatprep.subr.mxu0 0.0
        %255 = vmatpush1.msra.mxu0 0.0
        %256 = vmatprep.subr.mxu0 0.0
        %257 = vmatpush1.msra.mxu0 0.0
        %258 = vmatprep.subr.mxu0 0.0
        %259 = vmatpush1.msra.mxu0 0.0
        %260 = vmatprep.subr.mxu0 0.0
        %261 = vmatpush1.msra.mxu0 0.0
        %262 = vmatprep.subr.mxu0 0.0
        %263 = vmatpush1.msra.mxu0 0.0
        %264 = vmatprep.mubr.f32.mxu0 0.0
        %265 = vmatmul.mubr.f32.gmra.mrb[0].mxu0 %v194
        %v266 = vpop.f32.mrb[0].mxu0
        %v267 = vadd.f32 0.0, %v266
        %v268 = vpop.f32.mrb[0].mxu0
        %269 = vdwg.mxu0
        %v271 = vsel %vm192, %v185, 0
        %v274 = vsel %vm196, %v186, 0
        %276 = vmatprep.subr.mxu0 0.0
        %277 = vmatpush1.msra.mxu0 %v274
        %278 = vmatprep.subr.mxu0 0.0
        %279 = vmatpush1.msra.mxu0 0.0
        %280 = vmatprep.subr.mxu0 0.0
        %281 = vmatpush1.msra.mxu0 0.0
        %282 = vmatprep.subr.mxu0 0.0
        %283 = vmatpush1.msra.mxu0 0.0
        %284 = vmatprep.subr.mxu0 0.0
        %285 = vmatpush1.msra.mxu0 0.0
        %286 = vmatprep.subr.mxu0 0.0
        %287 = vmatpush1.msra.mxu0 0.0
        %288 = vmatprep.subr.mxu0 0.0
        %289 = vmatpush1.msra.mxu0 0.0
        %290 = vmatprep.subr.mxu0 0.0
        %291 = vmatpush1.msra.mxu0 0.0
        %292 = vmatprep.subr.mxu0 0.0
        %293 = vmatpush1.msra.mxu0 0.0
        %294 = vmatprep.subr.mxu0 0.0
        %295 = vmatpush1.msra.mxu0 0.0
        %296 = vmatprep.subr.mxu0 0.0
        %297 = vmatpush1.msra.mxu0 0.0
        %298 = vmatprep.subr.mxu0 0.0
        %299 = vmatpush1.msra.mxu0 0.0
        %300 = vmatprep.subr.mxu0 0.0
        %301 = vmatpush1.msra.mxu0 0.0
        %302 = vmatprep.subr.mxu0 0.0
        %303 = vmatpush1.msra.mxu0 0.0
        %304 = vmatprep.subr.mxu0 0.0
        %305 = vmatpush1.msra.mxu0 0.0
        %306 = vmatprep.subr.mxu0 0.0
        %307 = vmatpush1.msra.mxu0 0.0
        %308 = vmatprep.subr.mxu0 0.0
        %309 = vmatpush1.msra.mxu0 0.0
        %310 = vmatprep.subr.mxu0 0.0
        %311 = vmatpush1.msra.mxu0 0.0
        %312 = vmatprep.subr.mxu0 0.0
        %313 = vmatpush1.msra.mxu0 0.0
        %314 = vmatprep.subr.mxu0 0.0
        %315 = vmatpush1.msra.mxu0 0.0
        %316 = vmatprep.subr.mxu0 0.0
        %317 = vmatpush1.msra.mxu0 0.0
        %318 = vmatprep.subr.mxu0 0.0
        %319 = vmatpush1.msra.mxu0 0.0
        %320 = vmatprep.subr.mxu0 0.0
        %321 = vmatpush1.msra.mxu0 0.0
        %322 = vmatprep.subr.mxu0 0.0
        %323 = vmatpush1.msra.mxu0 0.0
        %324 = vmatprep.subr.mxu0 0.0
        %325 = vmatpush1.msra.mxu0 0.0
        %326 = vmatprep.subr.mxu0 0.0
        %327 = vmatpush1.msra.mxu0 0.0
        %328 = vmatprep.subr.mxu0 0.0
        %329 = vmatpush1.msra.mxu0 0.0
        %330 = vmatprep.subr.mxu0 0.0
        %331 = vmatpush1.msra.mxu0 0.0
        %332 = vmatprep.subr.mxu0 0.0
        %333 = vmatpush1.msra.mxu0 0.0
        %334 = vmatprep.subr.mxu0 0.0
        %335 = vmatpush1.msra.mxu0 0.0
        %336 = vmatprep.subr.mxu0 0.0
        %337 = vmatpush1.msra.mxu0 0.0
        %338 = vmatprep.subr.mxu0 0.0
        %339 = vmatpush1.msra.mxu0 0.0
        %340 = vmatprep.mubr.f32.mxu0 0.0
        %341 = vmatmul.mubr.f32.gmra.mrb[0].mxu0 %v271
        %v342 = vpop.f32.mrb[0].mxu0
        %v343 = vadd.f32 %v267, %v342
        %v344 = vpop.f32.mrb[0].mxu0
        %345 = vdwg.mxu0
        %s346 = sadd.s32 %s183, 2
        %s347 = scalar_lea.vmem %s182, %s346
        %v348 = vld [vmem:[%s347] ss:$4 sm:$0xff]
        %s349 = scalar_lea.vmem %s1, 8
        %v350 = vld [vmem:[%s349] sm:$0xf]
        %v352 = vsel %vm192, %v348, 0
        %v355 = vsel %vm196, %v350, 0
        %357 = vmatprep.subr.mxu0 0.0
        %358 = vmatpush1.msra.mxu0 %v355
        %359 = vmatprep.subr.mxu0 0.0
        %360 = vmatpush1.msra.mxu0 0.0
        %361 = vmatprep.subr.mxu0 0.0
        %362 = vmatpush1.msra.mxu0 0.0
        %363 = vmatprep.subr.mxu0 0.0
        %364 = vmatpush1.msra.mxu0 0.0
        %365 = vmatprep.subr.mxu0 0.0
        %366 = vmatpush1.msra.mxu0 0.0
        %367 = vmatprep.subr.mxu0 0.0
        %368 = vmatpush1.msra.mxu0 0.0
        %369 = vmatprep.subr.mxu0 0.0
        %370 = vmatpush1.msra.mxu0 0.0
        %371 = vmatprep.subr.mxu0 0.0
        %372 = vmatpush1.msra.mxu0 0.0
        %373 = vmatprep.subr.mxu0 0.0
        %374 = vmatpush1.msra.mxu0 0.0
        %375 = vmatprep.subr.mxu0 0.0
        %376 = vmatpush1.msra.mxu0 0.0
        %377 = vmatprep.subr.mxu0 0.0
        %378 = vmatpush1.msra.mxu0 0.0
        %379 = vmatprep.subr.mxu0 0.0
        %380 = vmatpush1.msra.mxu0 0.0
        %381 = vmatprep.subr.mxu0 0.0
        %382 = vmatpush1.msra.mxu0 0.0
        %383 = vmatprep.subr.mxu0 0.0
        %384 = vmatpush1.msra.mxu0 0.0
        %385 = vmatprep.subr.mxu0 0.0
        %386 = vmatpush1.msra.mxu0 0.0
        %387 = vmatprep.subr.mxu0 0.0
        %388 = vmatpush1.msra.mxu0 0.0
        %389 = vmatprep.subr.mxu0 0.0
        %390 = vmatpush1.msra.mxu0 0.0
        %391 = vmatprep.subr.mxu0 0.0
        %392 = vmatpush1.msra.mxu0 0.0
        %393 = vmatprep.subr.mxu0 0.0
        %394 = vmatpush1.msra.mxu0 0.0
        %395 = vmatprep.subr.mxu0 0.0
        %396 = vmatpush1.msra.mxu0 0.0
        %397 = vmatprep.subr.mxu0 0.0
        %398 = vmatpush1.msra.mxu0 0.0
        %399 = vmatprep.subr.mxu0 0.0
        %400 = vmatpush1.msra.mxu0 0.0
        %401 = vmatprep.subr.mxu0 0.0
        %402 = vmatpush1.msra.mxu0 0.0
        %403 = vmatprep.subr.mxu0 0.0
        %404 = vmatpush1.msra.mxu0 0.0
        %405 = vmatprep.subr.mxu0 0.0
        %406 = vmatpush1.msra.mxu0 0.0
        %407 = vmatprep.subr.mxu0 0.0
        %408 = vmatpush1.msra.mxu0 0.0
        %409 = vmatprep.subr.mxu0 0.0
        %410 = vmatpush1.msra.mxu0 0.0
        %411 = vmatprep.subr.mxu0 0.0
        %412 = vmatpush1.msra.mxu0 0.0
        %413 = vmatprep.subr.mxu0 0.0
        %414 = vmatpush1.msra.mxu0 0.0
        %415 = vmatprep.subr.mxu0 0.0
        %416 = vmatpush1.msra.mxu0 0.0
        %417 = vmatprep.subr.mxu0 0.0
        %418 = vmatpush1.msra.mxu0 0.0
        %419 = vmatprep.subr.mxu0 0.0
        %420 = vmatpush1.msra.mxu0 0.0
        %421 = vmatprep.mubr.f32.mxu0 0.0
        %422 = vmatmul.mubr.f32.gmra.mrb[0].mxu0 %v352
        %v423 = vpop.f32.mrb[0].mxu0
        %v424 = vadd.f32 0.0, %v423
        %v425 = vpop.f32.mrb[0].mxu0
        %426 = vdwg.mxu0
        %v427 = vadd.f32 %v343, %v424
        %s428 = sadd.s32 %s183, 3
        %s429 = scalar_lea.vmem %s182, %s428
        %v430 = vld [vmem:[%s429] ss:$4 sm:$0xff]
        %s431 = scalar_lea.vmem %s1, 12
        %v432 = vld [vmem:[%s431] sm:$0xf]
        %v434 = vsel %vm192, %v430, 0
        %v437 = vsel %vm196, %v432, 0
        %439 = vmatprep.subr.mxu0 0.0
        %440 = vmatpush1.msra.mxu0 %v437
        %441 = vmatprep.subr.mxu0 0.0
        %442 = vmatpush1.msra.mxu0 0.0
        %443 = vmatprep.subr.mxu0 0.0
        %444 = vmatpush1.msra.mxu0 0.0
        %445 = vmatprep.subr.mxu0 0.0
        %446 = vmatpush1.msra.mxu0 0.0
        %447 = vmatprep.subr.mxu0 0.0
        %448 = vmatpush1.msra.mxu0 0.0
        %449 = vmatprep.subr.mxu0 0.0
        %450 = vmatpush1.msra.mxu0 0.0
        %451 = vmatprep.subr.mxu0 0.0
        %452 = vmatpush1.msra.mxu0 0.0
        %453 = vmatprep.subr.mxu0 0.0
        %454 = vmatpush1.msra.mxu0 0.0
        %455 = vmatprep.subr.mxu0 0.0
        %456 = vmatpush1.msra.mxu0 0.0
        %457 = vmatprep.subr.mxu0 0.0
        %458 = vmatpush1.msra.mxu0 0.0
        %459 = vmatprep.subr.mxu0 0.0
        %460 = vmatpush1.msra.mxu0 0.0
        %461 = vmatprep.subr.mxu0 0.0
        %462 = vmatpush1.msra.mxu0 0.0
        %463 = vmatprep.subr.mxu0 0.0
        %464 = vmatpush1.msra.mxu0 0.0
        %465 = vmatprep.subr.mxu0 0.0
        %466 = vmatpush1.msra.mxu0 0.0
        %467 = vmatprep.subr.mxu0 0.0
        %468 = vmatpush1.msra.mxu0 0.0
        %469 = vmatprep.subr.mxu0 0.0
        %470 = vmatpush1.msra.mxu0 0.0
        %471 = vmatprep.subr.mxu0 0.0
        %472 = vmatpush1.msra.mxu0 0.0
        %473 = vmatprep.subr.mxu0 0.0
        %474 = vmatpush1.msra.mxu0 0.0
        %475 = vmatprep.subr.mxu0 0.0
        %476 = vmatpush1.msra.mxu0 0.0
        %477 = vmatprep.subr.mxu0 0.0
        %478 = vmatpush1.msra.mxu0 0.0
        %479 = vmatprep.subr.mxu0 0.0
        %480 = vmatpush1.msra.mxu0 0.0
        %481 = vmatprep.subr.mxu0 0.0
        %482 = vmatpush1.msra.mxu0 0.0
        %483 = vmatprep.subr.mxu0 0.0
        %484 = vmatpush1.msra.mxu0 0.0
        %485 = vmatprep.subr.mxu0 0.0
        %486 = vmatpush1.msra.mxu0 0.0
        %487 = vmatprep.subr.mxu0 0.0
        %488 = vmatpush1.msra.mxu0 0.0
        %489 = vmatprep.subr.mxu0 0.0
        %490 = vmatpush1.msra.mxu0 0.0
        %491 = vmatprep.subr.mxu0 0.0
        %492 = vmatpush1.msra.mxu0 0.0
        %493 = vmatprep.subr.mxu0 0.0
        %494 = vmatpush1.msra.mxu0 0.0
        %495 = vmatprep.subr.mxu0 0.0
        %496 = vmatpush1.msra.mxu0 0.0
        %497 = vmatprep.subr.mxu0 0.0
        %498 = vmatpush1.msra.mxu0 0.0
        %499 = vmatprep.subr.mxu0 0.0
        %500 = vmatpush1.msra.mxu0 0.0
        %501 = vmatprep.subr.mxu0 0.0
        %502 = vmatpush1.msra.mxu0 0.0
        %503 = vmatprep.mubr.f32.mxu0 0.0
        %504 = vmatmul.mubr.f32.gmra.mrb[0].mxu0 %v434
        %v505 = vpop.f32.mrb[0].mxu0
        %v506 = vadd.f32 0.0, %v505
        %v507 = vpop.f32.mrb[0].mxu0
        %508 = vdwg.mxu0
        %v509 = vadd.f32 %v427, %v506
        %v510 = vld [vmem:[%s2] sm:$0x1]
        %v512 = vlaneseq
        %v513 = vshrl.u32 %v512, 7
        %v514 = vsub.s32 0, %v513
        %v515 = vrot.slane %v510, %v514
        %v517 = vadd.f32 %v509, %v515
        %518 = vst [vmem:[%s177] sm:$0xff] %v517
        %s519 = sand.u32 %s107, 1
        %s520 = scalar_lea.sflag [#allocation3], %s519
        %s521 = sand.u32 %s107, 1
        %s522 = smul.addr %s521, 8
        %s523 = scalar_lea.vmem [#allocation2], %s522
        // Predicated region
        $region33: #{tpu_custom_call.1} parent=31 // pred_check
          %p524 = pneg %p117
        $region34: #{tpu_custom_call.1} parent=31 // pred_check_branch
          %526 = sbr.rel (%p524) target = $region36
        $region35: #{tpu_custom_call.1} parent=31 // pred_region
          %s528 = ssub.s32 128, 128
          %529 = vsyncadd %s520, %s528
          %s530 = sadd.s32 %s22, %s21
          %s531 = smul.addr %s530, 128
          %s532 = scalar_lea.hbm %s3, %s531
          %s534 = sshll.u32 %s523, 4
          %s535 = int_to_ptr.vmem [resolvable:$true] %s534
          %537 = dma.vmem_to_hbm [thread:$0]  %s535, 128, %s532, %s520
        $region36: #{tpu_custom_call.1} parent=31 // pred_fallthru
          _
      $region32: #{tpu_custom_call.1} parent=5 // pred_fallthru
        _
      %p538 = scmp.le.s32.totalorder 2, %s12
      // Predicated region
      $region37: #{tpu_custom_call.1} parent=5 // pred_check
        %p539 = pneg %p538
      $region38: #{tpu_custom_call.1} parent=5 // pred_check_branch
        %541 = sbr.rel (%p539) target = $region40
      $region39: #{tpu_custom_call.1} parent=5 // pred_region
        %s542 = ssub.s32 %s12, 2
        // Predicated region
        $region41: #{tpu_custom_call.1} parent=39 // pred_check
          %p543 = pneg %p123
        $region42: #{tpu_custom_call.1} parent=39 // pred_check_branch
          %545 = sbr.rel (%p543) target = $region44
        $region43: #{tpu_custom_call.1} parent=39 // pred_region
          %s546 = sand.u32 %s108, 1
          %s547 = scalar_lea.sflag [#allocation3], %s546
          %s548 = sand.u32 %s108, 1
          %s549 = smul.addr %s548, 8
          %s550 = scalar_lea.vmem [#allocation2], %s549
          %551 = dma.done %s547, 128
        $region44: #{tpu_custom_call.1} parent=39 // pred_fallthru
          _
      $region40: #{tpu_custom_call.1} parent=5 // pred_fallthru
        _
    $region6: #{tpu_custom_call.1} parent=1 // loop_footer
      %s16 = sadd.s32 1, %s12
    $region7: #{tpu_custom_call.1} parent=1 // loop_footer_branch
      %11 = sbr.rel target = $region3
    $region8: #{tpu_custom_call.1} parent=1 // loop_exit
      _
    %552 = vsyncpa [#allocation3], 1
    %s553 = scalar_lea.sflag [#allocation3], 1
    %554 = vsyncpa %s553, 1

</llo_original>
